<compile_context>
chip_gen: v7x
topology: tpu7x:2x2x1
jax: 0.10.0
libtpu: 0.0.40
codegen_flags: <defaults>
</compile_context>

<pallas_src>
import math

import jax
import jax.numpy as jnp
from jax.experimental import pallas as pl
from jax.experimental.pallas import tpu as pltpu


def _round_up(n: int, m: int) -> int:
    return ((n + m - 1) // m) * m


def _make_kernel(output_dim: int, scale_lb: float):
    # output_dim / scale_lb are plain Python scalars -> compile-time
    # constants inside the kernel (no captured traced values).
    def kernel(x_ref, w_ref, b_ref, y_ref):
        x = x_ref[...]
        # Fused matmul for both heads: (TILE_B, K) @ (K, 2N) on the MXU,
        # f32 accumulation.
        y = jnp.dot(x, w_ref[...], preferred_element_type=jnp.float32)
        y = y + b_ref[...]
        # Numerically stable softplus: log1p(exp(-|y|)) + max(y, 0), then
        # clamp_min(scale_lb).  Applied only to the scale half (lanes >= N).
        sp = jnp.log1p(jnp.exp(-jnp.abs(y))) + jnp.maximum(y, 0.0)
        sp = jnp.maximum(sp, scale_lb)
        col = jax.lax.broadcasted_iota(jnp.int32, y.shape, 1)
        y_ref[...] = jnp.where(col < output_dim, y, sp).astype(y_ref.dtype)

    return kernel


def prepare_params(weight, bias):
    """One-time param prep (hoist out of the per-call path).

    weight: (2*output_dim, input_dim)  -- PyTorch nn.Linear layout
    bias:   (2*output_dim,)
    Returns W_cat (input_dim, 2*output_dim), b_cat (1, 2*output_dim).
    """
    w_cat = jnp.asarray(weight, dtype=jnp.float32).T
    b_cat = jnp.asarray(bias, dtype=jnp.float32).reshape(1, -1)
    return w_cat, b_cat


def tanh_independent_normal_forward(
    x, w_cat, b_cat, *, output_dim, scale_lb=1e-4, tile_b=1024
):
    """Compute (loc, scale) of TanhIndependentNormalModule (state_dependent_std=True).

    x:     (B, input_dim)               float32
    w_cat: (input_dim, 2*output_dim)    float32   (from prepare_params)
    b_cat: (1, 2*output_dim)            float32   (from prepare_params)
    Returns (loc, scale), each (B, output_dim).
    """
    B, input_dim = x.shape
    two_n = 2 * output_dim
    assert w_cat.shape == (input_dim, two_n)
    assert b_cat.shape == (1, two_n)

    # Batch tile: multiple of 8 (sublane), capped; pad B to a tile multiple.
    tile_b = min(tile_b, _round_up(B, 8))
    padded_b = _round_up(B, tile_b)
    if padded_b != B:
        x = jnp.pad(x, ((0, padded_b - B), (0, 0)))

    grid = (padded_b // tile_b,)
    kernel = _make_kernel(int(output_dim), float(scale_lb))

    y = pl.pallas_call(
        kernel,
        out_shape=jax.ShapeDtypeStruct((padded_b, two_n), jnp.float32),
        grid=grid,
        in_specs=[
            pl.BlockSpec((tile_b, input_dim), lambda i: (i, 0)),   # x tiles
            pl.BlockSpec((input_dim, two_n), lambda i: (0, 0)),    # W resident
            pl.BlockSpec((1, two_n), lambda i: (0, 0)),            # b resident
        ],
        out_specs=pl.BlockSpec((tile_b, two_n), lambda i: (i, 0)),
        compiler_params=pltpu.CompilerParams(
            dimension_semantics=("parallel",),
        ),
    )(x, w_cat, b_cat)

    loc = y[:B, :output_dim]
    scale = y[:B, output_dim:]
    return loc, scale


def _reference_forward(x, weight, bias, *, output_dim, scale_lb=1e-4):
    y = x @ weight.T + bias
    loc = y[:, :output_dim]
    scale = jax.nn.softplus(y[:, output_dim:])
    scale = jnp.maximum(scale, scale_lb)
    return loc, scale


if __name__ == "__main__":
    # Small shapes consistent with the module: input_dim=32, output_dim=8, batch=16.
    input_dim = 32
    output_dim = 8
    batch = 16
    scale_lb = 1e-4

    key = jax.random.PRNGKey(0)
    kx, kw, kb = jax.random.split(key, 3)

    # Deterministic parameter init mimicking nn.Linear default:
    # uniform(-1/sqrt(input_dim), 1/sqrt(input_dim)).
    bound = 1.0 / math.sqrt(input_dim)
    weight = jax.random.uniform(
        kw, (2 * output_dim, input_dim), minval=-bound, maxval=bound, dtype=jnp.float32
    )
    bias = jax.random.uniform(
        kb, (2 * output_dim,), minval=-bound, maxval=bound, dtype=jnp.float32
    )
    x = jax.random.normal(kx, (batch, input_dim), dtype=jnp.float32)

    # One-time parameter prep (hoisted out of the per-call path).
    w_cat, b_cat = prepare_params(weight, bias)

    loc, scale = tanh_independent_normal_forward(
        x, w_cat, b_cat, output_dim=output_dim, scale_lb=scale_lb
    )
    jax.block_until_ready((loc, scale))

    loc_ref, scale_ref = _reference_forward(
        x, weight, bias, output_dim=output_dim, scale_lb=scale_lb
    )
    assert loc.shape == (batch, output_dim)
    assert scale.shape == (batch, output_dim)
    assert jnp.allclose(loc, loc_ref, atol=1e-5, rtol=1e-5), "loc mismatch"
    assert jnp.allclose(scale, scale_ref, atol=1e-5, rtol=1e-5), "scale mismatch"
    assert bool(jnp.all(scale >= scale_lb)), "scale lower bound violated"

    # TODO(synk): TanhNormalWithEntropy distribution object (sampling / log_prob /
    # entropy) is stochastic host-side logic, not part of the tensor hot path;
    # the kernel returns its parameters (loc, scale).
    print("KERNEL_OK")
</pallas_src>

<mosaic_0001>
module attributes {stable_mosaic.version = 11 : i64} {
  func.func @kernel(%arg0: i32, %arg1: memref<16x32xf32, #tpu.memory_space<vmem>>, %arg2: memref<32x16xf32, #tpu.memory_space<vmem>>, %arg3: memref<1x16xf32, #tpu.memory_space<vmem>>, %arg4: memref<16x16xf32, #tpu.memory_space<vmem>>) attributes {dimension_semantics = [#tpu.dimension_semantics<parallel>], iteration_bounds = array<i64: 1>, scalar_prefetch = 0 : i64, scratch_operands = 0 : i64, tpu.core_type = #tpu.core_type<tc>, window_params = [{transform_indices = @transform_0, window_bounds = array<i64: 16, 32>}, {pipeline_mode = #tpu.pipeline_mode<synchronous>, transform_indices = @transform_1, window_bounds = array<i64: 32, 16>}, {pipeline_mode = #tpu.pipeline_mode<synchronous>, transform_indices = @transform_2, window_bounds = array<i64: 1, 16>}, {transform_indices = @transform_3, window_bounds = array<i64: 16, 16>}]} {
    %c0 = arith.constant 0 : index
    %c0_0 = arith.constant 0 : index
    %0 = vector.load %arg1[%c0, %c0_0] : memref<16x32xf32, #tpu.memory_space<vmem>>, vector<16x32xf32>
    %c0_1 = arith.constant 0 : index
    %c0_2 = arith.constant 0 : index
    %1 = vector.load %arg2[%c0_1, %c0_2] : memref<32x16xf32, #tpu.memory_space<vmem>>, vector<32x16xf32>
    %cst = arith.constant dense<0.000000e+00> : vector<16x16xf32>
    %2 = tpu.matmul %0, %1, %cst {dimension_numbers = #tpu.dot_dimension_numbers<[1], [0], [0], [1], [0, 0, 1, 1], [], []>} : vector<16x32xf32>, vector<32x16xf32>, vector<16x16xf32> -> vector<16x16xf32>
    %c0_3 = arith.constant 0 : index
    %c0_4 = arith.constant 0 : index
    %3 = vector.load %arg3[%c0_3, %c0_4] : memref<1x16xf32, #tpu.memory_space<vmem>>, vector<1x16xf32>
    %4 = vector.broadcast %3 : vector<1x16xf32> to vector<16x16xf32>
    %5 = arith.addf %2, %4 : vector<16x16xf32>
    %6 = math.absf %5 : vector<16x16xf32>
    %cst_5 = arith.constant 0.000000e+00 : f32
    %7 = vector.broadcast %cst_5 : f32 to vector<16x16xf32>
    %8 = arith.subf %7, %6 : vector<16x16xf32>
    %9 = math.exp %8 : vector<16x16xf32>
    %10 = math.log1p %9 : vector<16x16xf32>
    %cst_6 = arith.constant 0.000000e+00 : f32
    %11 = vector.broadcast %cst_6 : f32 to vector<16x16xf32>
    %12 = arith.maximumf %5, %11 : vector<16x16xf32>
    %13 = arith.addf %10, %12 : vector<16x16xf32>
    %cst_7 = arith.constant 9.99999974E-5 : f32
    %14 = vector.broadcast %cst_7 : f32 to vector<16x16xf32>
    %15 = arith.maximumf %13, %14 : vector<16x16xf32>
    %16 = tpu.iota {dimensions = array<i32: 1>} : vector<16x16xi32>
    %c8_i32 = arith.constant 8 : i32
    %17 = vector.broadcast %c8_i32 : i32 to vector<16x16xi32>
    %18 = arith.cmpi slt, %16, %17 : vector<16x16xi32>
    %19 = arith.select %18, %5, %15 : vector<16x16xi1>, vector<16x16xf32>
    %c0_8 = arith.constant 0 : index
    %c0_9 = arith.constant 0 : index
    %20 = vector.load %arg4[%c0_8, %c0_9] : memref<16x16xf32, #tpu.memory_space<vmem>>, vector<16x16xf32>
    tpu.vector_store %arg4[%c0_8, %c0_9], %19 {strides = array<i32>} : memref<16x16xf32, #tpu.memory_space<vmem>>, vector<16x16xf32>,
    return
  }
  func.func @transform_0(%arg0: i32) -> (i32, i32) {
    %c0_i32 = arith.constant 0 : i32
    %c0_i32_0 = arith.constant 0 : i32
    return %arg0, %c0_i32 : i32, i32
  }
  func.func @transform_1(%arg0: i32) -> (i32, i32) {
    %c0_i32 = arith.constant 0 : i32
    %c0_i32_0 = arith.constant 0 : i32
    %c0_i32_1 = arith.constant 0 : i32
    return %c0_i32, %c0_i32_0 : i32, i32
  }
  func.func @transform_2(%arg0: i32) -> (i32, i32) {
    %c0_i32 = arith.constant 0 : i32
    %c0_i32_0 = arith.constant 0 : i32
    %c0_i32_1 = arith.constant 0 : i32
    return %c0_i32, %c0_i32_0 : i32, i32
  }
  func.func @transform_3(%arg0: i32) -> (i32, i32) {
    %c0_i32 = arith.constant 0 : i32
    %c0_i32_0 = arith.constant 0 : i32
    return %arg0, %c0_i32 : i32, i32
  }
}

</mosaic_0001>

<llo_original>
// kernel: tpu_custom_call.1
$region0: #{tpu_custom_call.1}
  #allocation0 [shape = 'u32[]', space=smem, size = 0x4, offset = 0x4, fixed_abs, tag = 'smem constant byte address 0x4 - core index']
  #allocation1 [shape = 'u32[144,128]{1,0:T(1,128)}', space=vmem, size = 0x12000, scoped, tag = 'internal scratch']
  %s0 = inlined_call_operand.vmem [shape: f32[16,32], index: 0, kind: input, shape index: {}]
  %s1 = inlined_call_operand.vmem [shape: f32[32,16], index: 1, kind: input, shape index: {}]
  %s2 = inlined_call_operand.vmem [shape: f32[1,16], index: 2, kind: input, shape index: {}]
  %s3 = inlined_call_operand.hbm [shape: f32[16,16], index: 3, kind: output, shape index: {}]
  %s4 = sld [smem:[#allocation0]]
  $region22: #{tpu_custom_call.1} parent=0
    _
  %s6 = ssub.s32 1, %s4
  %s7 = scalar_select 0, %s6, %s4
  $region1: #{tpu_custom_call.1} parent=0
    #allocation2 [shape = 'u8[8192]{0}', space=vmem, size = 0x2000, scoped, tag = 'output window, operand 0, single buffered']
    #allocation3 [shape = 's32[1]{0}', space=sflag, size = 0x4, scoped, tag = 'scoped memory for tpu_custom_call.1']
    %8 = vsyncpa [#allocation3], 0
    // Predicated region
    $region2: #{tpu_custom_call.1} parent=1 // pred_check
      _
    $region3: #{tpu_custom_call.1} parent=1 // pred_check_branch
      %10 = sbr.rel (0) target = $region5
    $region4: #{tpu_custom_call.1} parent=1 // pred_region
      _
    $region5: #{tpu_custom_call.1} parent=1 // pred_fallthru
      _
    // Predicated region
    $region6: #{tpu_custom_call.1} parent=1 // pred_check
      _
    $region7: #{tpu_custom_call.1} parent=1 // pred_check_branch
      %12 = sbr.rel (0) target = $region9
    $region8: #{tpu_custom_call.1} parent=1 // pred_region
      _
    $region9: #{tpu_custom_call.1} parent=1 // pred_fallthru
      _
    // Predicated region
    $region10: #{tpu_custom_call.1} parent=1 // pred_check
      _
    $region11: #{tpu_custom_call.1} parent=1 // pred_check_branch
      %14 = sbr.rel (0) target = $region13
    $region12: #{tpu_custom_call.1} parent=1 // pred_region
      _
    $region13: #{tpu_custom_call.1} parent=1 // pred_fallthru
      _
    %v15 = vld [vmem:[%s0] sm:$0xff]
    %v16 = vld [vmem:[%s0 + $0x8] sm:$0xff]
    %v17 = vld [vmem:[%s1] sm:$0xff]
    %v18 = vld [vmem:[%s1 + $0x8] sm:$0xff]
    %v19 = vld [vmem:[%s1 + $0x10] sm:$0xff]
    %v20 = vld [vmem:[%s1 + $0x18] sm:$0xff]
    %v21 = vld [vmem:[%s2] sm:$0x1]
    %v23 = vlaneseq
    %v24 = vshrl.u32 %v23, 7
    %v25 = vsub.s32 0, %v24
    %v26 = vrot.slane %v21, %v25
    %vm28 = vcmask 261120
    %v30 = vsel %vm28, %v15, 0
    %v33 = vsel %vm28, %v16, 0
    %35 = vmatprep.subr.mxu0 0.0
    %36 = vmatpush1.msra.mxu0 %v17
    %37 = vmatprep.subr.mxu0 0.0
    %38 = vmatpush1.msra.mxu0 %v18
    %39 = vmatprep.subr.mxu0 0.0
    %40 = vmatpush1.msra.mxu0 %v19
    %41 = vmatprep.subr.mxu0 0.0
    %42 = vmatpush1.msra.mxu0 %v20
    %43 = vmatprep.subr.mxu0 0.0
    %44 = vmatpush1.msra.mxu0 0.0
    %45 = vmatprep.subr.mxu0 0.0
    %46 = vmatpush1.msra.mxu0 0.0
    %47 = vmatprep.subr.mxu0 0.0
    %48 = vmatpush1.msra.mxu0 0.0
    %49 = vmatprep.subr.mxu0 0.0
    %50 = vmatpush1.msra.mxu0 0.0
    %51 = vmatprep.subr.mxu0 0.0
    %52 = vmatpush1.msra.mxu0 0.0
    %53 = vmatprep.subr.mxu0 0.0
    %54 = vmatpush1.msra.mxu0 0.0
    %55 = vmatprep.subr.mxu0 0.0
    %56 = vmatpush1.msra.mxu0 0.0
    %57 = vmatprep.subr.mxu0 0.0
    %58 = vmatpush1.msra.mxu0 0.0
    %59 = vmatprep.subr.mxu0 0.0
    %60 = vmatpush1.msra.mxu0 0.0
    %61 = vmatprep.subr.mxu0 0.0
    %62 = vmatpush1.msra.mxu0 0.0
    %63 = vmatprep.subr.mxu0 0.0
    %64 = vmatpush1.msra.mxu0 0.0
    %65 = vmatprep.subr.mxu0 0.0
    %66 = vmatpush1.msra.mxu0 0.0
    %67 = vmatprep.subr.mxu0 0.0
    %68 = vmatpush1.msra.mxu0 0.0
    %69 = vmatprep.subr.mxu0 0.0
    %70 = vmatpush1.msra.mxu0 0.0
    %71 = vmatprep.subr.mxu0 0.0
    %72 = vmatpush1.msra.mxu0 0.0
    %73 = vmatprep.subr.mxu0 0.0
    %74 = vmatpush1.msra.mxu0 0.0
    %75 = vmatprep.subr.mxu0 0.0
    %76 = vmatpush1.msra.mxu0 0.0
    %77 = vmatprep.subr.mxu0 0.0
    %78 = vmatpush1.msra.mxu0 0.0
    %79 = vmatprep.subr.mxu0 0.0
    %80 = vmatpush1.msra.mxu0 0.0
    %81 = vmatprep.subr.mxu0 0.0
    %82 = vmatpush1.msra.mxu0 0.0
    %83 = vmatprep.subr.mxu0 0.0
    %84 = vmatpush1.msra.mxu0 0.0
    %85 = vmatprep.subr.mxu0 0.0
    %86 = vmatpush1.msra.mxu0 0.0
    %87 = vmatprep.subr.mxu0 0.0
    %88 = vmatpush1.msra.mxu0 0.0
    %89 = vmatprep.subr.mxu0 0.0
    %90 = vmatpush1.msra.mxu0 0.0
    %91 = vmatprep.subr.mxu0 0.0
    %92 = vmatpush1.msra.mxu0 0.0
    %93 = vmatprep.subr.mxu0 0.0
    %94 = vmatpush1.msra.mxu0 0.0
    %95 = vmatprep.subr.mxu0 0.0
    %96 = vmatpush1.msra.mxu0 0.0
    %97 = vmatprep.subr.mxu0 0.0
    %98 = vmatpush1.msra.mxu0 0.0
    %99 = vmatprep.mubr.f32.mxu0 0.0
    %100 = vmatmul.mubr.f32.gmra.mrb[0].mxu0 %v30
    %v101 = vpop.f32.mrb[0].mxu0
    %v102 = vadd.f32 %v26, %v101
    %v103 = vpop.f32.mrb[0].mxu0
    %104 = vmatprep.mubr.f32.mxu0 0.0
    %105 = vmatmul.mubr.f32.gmra.mrb[0].mxu0 %v33
    %v106 = vpop.f32.mrb[0].mxu0
    %v107 = vadd.f32 %v26, %v106
    %v108 = vpop.f32.mrb[0].mxu0
    %109 = vdwg.mxu0
    %v110 = vand.u32 2147483647, %v102
    %v111 = vand.u32 2147483647, %v107
    %v112 = vsub.f32 0.0, %v110
    %v113 = vsub.f32 0.0, %v111
    %v114 = vmul.f32 %v112, 1.442695
    %v115 = vpow.pop %v114
    %v116 = vmul.f32 %v113, 1.442695
    %v117 = vpow.pop %v116
    %v118 = vadd.f32 %v115, 1.0
    %v119 = vlog2.pop %v118
    %v120 = vmul.f32 %v119, 0.6931472
    %v121 = vmul.f32 -0.5, %v115
    %v122 = vadd.f32 %v121, 1.0
    %v123 = vmul.f32 %v122, %v115
    %v124 = vand.u32 2147483647, %v115
    %vm125 = vcmp.lt.f32.partialorder %v124, 0.0004427343
    %v126 = vsel %vm125, %v123, %v120
    %v127 = vadd.f32 %v117, 1.0
    %v128 = vlog2.pop %v127
    %v129 = vmul.f32 %v128, 0.6931472
    %v130 = vmul.f32 -0.5, %v117
    %v131 = vadd.f32 %v130, 1.0
    %v132 = vmul.f32 %v131, %v117
    %v133 = vand.u32 2147483647, %v117
    %vm134 = vcmp.lt.f32.partialorder %v133, 0.0004427343
    %v135 = vsel %vm134, %v132, %v129
    %v136 = vmax.f32 %v102, 0.0
    %v137 = vmax.f32 %v107, 0.0
    %v138 = vadd.f32 %v126, %v136
    %v139 = vadd.f32 %v135, %v137
    %v140 = vmax.f32 %v138, 0.0001
    %v141 = vmax.f32 %v139, 0.0001
    %v142 = vlaneseq
    %v143 = vand.u32 %v142, 127
    %vm144 = vcmp.lt.s32.totalorder %v143, 8
    %v145 = vsel %vm144, %v102, %v140
    %v146 = vsel %vm144, %v107, %v141
    %vm147 = vcmask 130048
    %148 = vst.msk [vmem:[#allocation2] sm:$0xff] %vm147, %v145
    %149 = vst.msk [vmem:[#allocation2 + $0x8] sm:$0xff] %vm147, %v146
    // Predicated region
    $region14: #{tpu_custom_call.1} parent=1 // pred_check
      _
    $region15: #{tpu_custom_call.1} parent=1 // pred_check_branch
      %151 = sbr.rel (0) target = $region17
    $region16: #{tpu_custom_call.1} parent=1 // pred_region
      %s153 = ssub.s32 256, 256
      %154 = vsyncadd [#allocation3], %s153
      %s155 = sshll.u32 [#allocation2], 4
      %s156 = int_to_ptr.vmem [resolvable:$true] %s155
      %161 = dma.vmem_to_hbm [thread:$0]  %s156, 256, %s3, [#allocation3], 128, 128, 8
    $region17: #{tpu_custom_call.1} parent=1 // pred_fallthru
      _
    // Predicated region
    $region18: #{tpu_custom_call.1} parent=1 // pred_check
      _
    $region19: #{tpu_custom_call.1} parent=1 // pred_check_branch
      %163 = sbr.rel (0) target = $region21
    $region20: #{tpu_custom_call.1} parent=1 // pred_region
      %164 = dma.done [#allocation3], 256
    $region21: #{tpu_custom_call.1} parent=1 // pred_fallthru
      _
    %165 = vsyncpa [#allocation3], 1

</llo_original>
